<compile_context>
chip_gen: v5e
topology: v5e:2x2
jax: 0.10.0
libtpu: 0.0.40
codegen_flags: <defaults>
</compile_context>

<pallas_src>
import numpy as np
import jax
import jax.numpy as jnp
from jax.experimental import pallas as pl
from jax.experimental.pallas import tpu as pltpu

PWL_TYPE = "sigmoid"
SCALE = 0.25
LANES = 128
MAX_ROW_BLOCK = 4096      # (4096,128) f32 block = 2 MiB; 2x(in+out) double-buffer ~ 8 MiB VMEM


def _make_pwl_json_params(n_split: int = 15):
    """Deterministic stand-in for the JSON file: PWL fit of sigmoid.

    len(bias) == len(coeff) == len(split_points) + 1 (one segment per interval
    plus the two flat tails), matching the usual hardpwl JSON layout.
    """
    sp = np.linspace(-8.0, 8.0, n_split).astype(np.float64)
    sig = lambda v: 1.0 / (1.0 + np.exp(-v))
    coeff = np.zeros(n_split + 1, dtype=np.float64)
    bias = np.zeros(n_split + 1, dtype=np.float64)
    coeff[0], bias[0] = 0.0, sig(sp[0])              # (-inf, sp[0])
    for i in range(1, n_split):                      # [sp[i-1], sp[i])
        x0, x1 = sp[i - 1], sp[i]
        y0, y1 = sig(x0), sig(x1)
        coeff[i] = (y1 - y0) / (x1 - x0)
        bias[i] = y0 - coeff[i] * x0
    coeff[-1], bias[-1] = 0.0, sig(sp[-1])           # [sp[-1], inf)
    return {"split_points": sp.tolist(), "bias": bias.tolist(),
            "coeff": coeff.tolist()}


# ---- mirror of __init__/forward parameter plumbing (trace-time constants) ----
_scale_bit = int(abs(np.log2(SCALE)))
_decimal_bit = 16 - 3 - _scale_bit                   # = 11
if _decimal_bit > 13:
    raise ValueError(f"decimal_bit is {_decimal_bit}, which is greater than 13.")
_PWL_FUNCS = {PWL_TYPE: {str(_decimal_bit): _make_pwl_json_params()}}
_params = _PWL_FUNCS[PWL_TYPE][str(_decimal_bit)]

# Kernel-side constants.  SCALE is an exact power of two, so folding it into the
# slope/intercept (pwl*scale == (coeff*scale)*x + bias) is bit-exact versus
# torch's "(coeff*x + bias/scale) * scale" ordering and removes one multiply.
SEG_POINT_SCALE = tuple(np.float32(v / SCALE) for v in _params["split_points"])
COEFF_X_SCALE = tuple(np.float32(v * SCALE) for v in _params["coeff"])
BIAS = tuple(np.float32(v) for v in _params["bias"])
HALF_SCALE = np.float32(0.5 * SCALE)


def _pwl_scaled(x):
    """pwl(x) * SCALE via coefficient-select.

    Descending single-compare chain: the final (slope, intercept) is the segment
    with the smallest i such that x < sp[i] (top tail if none) — exactly the
    piecewise map of the torch where-chain, including the boundary convention
    (x == sp[i] falls into segment i+1).  One cmp + two selects per split point,
    then a single mul+add, instead of mul+add inside every branch.
    NOTE: ~45 splatted scalar constants; if a bundle dump ever shows vreg spills
    move sp/coeff/bias to SMEM and loop with lax.fori_loop(unroll=True).
    """
    co = jnp.full_like(x, COEFF_X_SCALE[-1])          # x >= sp[-1] tail (slope 0)
    ic = jnp.full_like(x, BIAS[-1])
    for i in range(len(SEG_POINT_SCALE) - 1, -1, -1):
        m = x < SEG_POINT_SCALE[i]
        co = jnp.where(m, COEFF_X_SCALE[i], co)
        ic = jnp.where(m, BIAS[i], ic)
    return co * x + ic


def _hardpwl_kernel(x_ref, o_ref):
    # TODO(synk): on v6e/v7x a native-bf16 compute path (skip the f32 upcast)
    # would halve VALU work for bf16 callers; kept f32 for cross-generation
    # correctness (v5e has no bf16 VALU) and parity with the f32 reference.
    x = x_ref[...].astype(jnp.float32)

    pwl_s = _pwl_scaled(x)                            # == pwl(x) * SCALE

    # nn.Sigmoid()(x*SCALE) as a single EUP tanh: sigmoid(y) = 0.5*tanh(y/2)+0.5
    # (one EUP push instead of exp + reciprocal).
    act = 0.5 * jnp.tanh(x * HALF_SCALE) + 0.5

    # Forward value of "(pwl*scale - act).detach() + act".  The act term is kept
    # (not algebraically removed) so float ordering and NaN propagation match
    # the torch module.
    # TODO(synk): pallas_call is not auto-differentiated; wrap hardpwl_forward
    # in jax.custom_vjp with a sigmoid-derivative backward if the STE gradient
    # of the torch module is needed.
    out = jax.lax.stop_gradient(pwl_s - act) + act
    o_ref[...] = out.astype(o_ref.dtype)


def _hardpwl_jnp(x):
    """Same math as the kernel, for sub-tile tails / tiny inputs."""
    xf = x.astype(jnp.float32)
    pwl_s = _pwl_scaled(xf)
    act = 0.5 * jnp.tanh(xf * HALF_SCALE) + 0.5
    return (jax.lax.stop_gradient(pwl_s - act) + act).astype(x.dtype)


def _round_up(a, b):
    return ((a + b - 1) // b) * b


def hardpwl_forward(x):
    """Elementwise hardpwl forward. Accepts any shape (e.g. NCHW) and dtype."""
    orig_shape, orig_dtype = x.shape, x.dtype
    flat = x.reshape(-1)
    n = flat.shape[0]

    # (sublane, 128) tile granularity depends on dtype packing
    # (8 for 4-byte, 16 for 2-byte, 32 for 1-byte).
    itemsize = np.dtype(orig_dtype).itemsize
    sublane = max(8, 32 // max(itemsize, 1))
    tile = sublane * LANES

    n_main = (n // tile) * tile
    if n_main == 0:
        # Sub-tile input: a kernel launch is pure overhead.
        return _hardpwl_jnp(flat).reshape(orig_shape)

    main = flat if n_main == n else flat[:n_main]
    x2d = main.reshape(-1, LANES)
    rows = x2d.shape[0]                               # multiple of `sublane`

    # Block size: big enough to amortize the ~0.35 us per-grid-step overhead,
    # small enough to stay well inside v7x's 64 MiB VMEM, and always >= 2
    # blocks so both v7x TensorCores get work on small/medium inputs
    # (no effect on v5e/v6e, which have a single TC).
    row_block = min(MAX_ROW_BLOCK, _round_up(pl.cdiv(rows, 2), sublane))
    grid = pl.cdiv(rows, row_block)                   # partial last block handled by Pallas

    out2d = pl.pallas_call(
        _hardpwl_kernel,
        out_shape=jax.ShapeDtypeStruct(x2d.shape, orig_dtype),
        grid_spec=pl.GridSpec(
            grid=(grid,),
            in_specs=[pl.BlockSpec((row_block, LANES), lambda i: (i, 0))],
            out_specs=pl.BlockSpec((row_block, LANES), lambda i: (i, 0)),
        ),
        compiler_params=pltpu.CompilerParams(
            dimension_semantics=("parallel",),        # shard blocks over 2 TCs on v7x
            vmem_limit_bytes=32 * 1024 * 1024,        # <= ~8 MiB of buffers at max block
        ),
    )(x2d)

    out_main = out2d.reshape(-1)
    if n_main == n:
        return out_main.reshape(orig_shape)
    # Misaligned tail (< one tile): compute with plain jnp instead of paying a
    # full-array pad + slice round trip through HBM.
    tail = _hardpwl_jnp(flat[n_main:])
    return jnp.concatenate([out_main, tail]).reshape(orig_shape)


def _reference_forward(x):
    """Pure-JAX re-statement of the PyTorch forward (for correctness check)."""
    scale = jnp.float32(SCALE)
    sp = jnp.asarray(_params["split_points"], dtype=jnp.float32) / scale
    ic = jnp.asarray(_params["bias"], dtype=jnp.float32) / scale
    co = jnp.asarray(_params["coeff"], dtype=jnp.float32)
    pwl = jnp.zeros_like(x)
    pwl = jnp.where(x < sp[0], ic[0] + co[0] * x, pwl)
    for i in range(sp.shape[0]):                      # keeps torch's i==0 quirk
        mask = (x >= sp[i - 1]) & (x < sp[i])
        pwl = jnp.where(mask, ic[i] + co[i] * x, pwl)
    pwl = jnp.where(x >= sp[-1], ic[-1] + co[-1] * x, pwl)
    act = 1.0 / (1.0 + jnp.exp(-x * scale))
    return (pwl * scale - act) + act


if __name__ == "__main__":
    key = jax.random.PRNGKey(0)
    # NCHW input like the PyTorch module would see (batch=2, channels=4, 16x16).
    x = jax.random.normal(key, (2, 4, 16, 16), dtype=jnp.float32) * 8.0

    out = jax.block_until_ready(hardpwl_forward(x))
    assert out.shape == x.shape and out.dtype == x.dtype
    np.testing.assert_allclose(np.asarray(out), np.asarray(_reference_forward(x)),
                               rtol=1e-5, atol=1e-5)

    # Non-tile-aligned shape: exercises the kernel-prefix + jnp-tail path
    # (no pad/slice HBM passes).
    x2 = jax.random.normal(jax.random.PRNGKey(1), (3, 5, 7, 11), dtype=jnp.float32) * 8.0
    out2 = jax.block_until_ready(hardpwl_forward(x2))
    assert out2.shape == x2.shape and out2.dtype == x2.dtype
    np.testing.assert_allclose(np.asarray(out2), np.asarray(_reference_forward(x2)),
                               rtol=1e-5, atol=1e-5)

    print("KERNEL_OK")
</pallas_src>

<mosaic_0001>
module attributes {stable_mosaic.version = 11 : i64} {
  func.func @_hardpwl_kernel(%arg0: i32, %arg1: memref<8x128xf32, #tpu.memory_space<vmem>>, %arg2: memref<8x128xf32, #tpu.memory_space<vmem>>) attributes {dimension_semantics = [#tpu.dimension_semantics<parallel>], iteration_bounds = array<i64: 2>, scalar_prefetch = 0 : i64, scratch_operands = 0 : i64, tpu.core_type = #tpu.core_type<tc>, window_params = [{transform_indices = @transform_0, window_bounds = array<i64: 8, 128>}, {transform_indices = @transform_1, window_bounds = array<i64: 8, 128>}]} {
    %c0 = arith.constant 0 : index
    %c0_0 = arith.constant 0 : index
    %0 = vector.load %arg1[%c0, %c0_0] : memref<8x128xf32, #tpu.memory_space<vmem>>, vector<8x128xf32>
    %cst = arith.constant 0.000000e+00 : f32
    %1 = vector.broadcast %cst : f32 to vector<8x128xf32>
    %cst_1 = arith.constant 0.999664664 : f32
    %2 = vector.broadcast %cst_1 : f32 to vector<8x128xf32>
    %cst_2 = arith.constant 3.200000e+01 : f32
    %3 = vector.broadcast %cst_2 : f32 to vector<8x128xf32>
    %4 = arith.cmpf olt, %0, %3 : vector<8x128xf32>
    %cst_3 = arith.constant 1.56506794E-4 : f32
    %5 = vector.broadcast %cst_3 : f32 to vector<8x128xf32>
    %6 = arith.select %4, %5, %1 : vector<8x128xi1>, vector<8x128xf32>
    %cst_4 = arith.constant 0.994656443 : f32
    %7 = vector.broadcast %cst_4 : f32 to vector<8x128xf32>
    %8 = arith.select %4, %7, %2 : vector<8x128xi1>, vector<8x128xf32>
    %cst_5 = arith.constant 27.4285717 : f32
    %9 = vector.broadcast %cst_5 : f32 to vector<8x128xf32>
    %10 = arith.cmpf olt, %0, %9 : vector<8x128xf32>
    %cst_6 = arith.constant 4.89311293E-4 : f32
    %11 = vector.broadcast %cst_6 : f32 to vector<8x128xf32>
    %12 = arith.select %10, %11, %6 : vector<8x128xi1>, vector<8x128xf32>
    %cst_7 = arith.constant 0.985528051 : f32
    %13 = vector.broadcast %cst_7 : f32 to vector<8x128xf32>
    %14 = arith.select %10, %13, %8 : vector<8x128xi1>, vector<8x128xf32>
    %cst_8 = arith.constant 22.8571434 : f32
    %15 = vector.broadcast %cst_8 : f32 to vector<8x128xf32>
    %16 = arith.cmpf olt, %0, %15 : vector<8x128xf32>
    %cst_9 = arith.constant 0.00152023067 : f32
    %17 = vector.broadcast %cst_9 : f32 to vector<8x128xf32>
    %18 = arith.select %16, %17, %12 : vector<8x128xi1>, vector<8x128xf32>
    %cst_10 = arith.constant 0.96196419 : f32
    %19 = vector.broadcast %cst_10 : f32 to vector<8x128xf32>
    %20 = arith.select %16, %19, %14 : vector<8x128xi1>, vector<8x128xf32>
    %cst_11 = arith.constant 18.2857151 : f32
    %21 = vector.broadcast %cst_11 : f32 to vector<8x128xf32>
    %22 = arith.cmpf olt, %0, %21 : vector<8x128xf32>
    %cst_12 = arith.constant 0.00463248696 : f32
    %23 = vector.broadcast %cst_12 : f32 to vector<8x128xf32>
    %24 = arith.select %22, %23, %18 : vector<8x128xi1>, vector<8x128xf32>
    %cst_13 = arith.constant 0.90505439 : f32
    %25 = vector.broadcast %cst_13 : f32 to vector<8x128xf32>
    %26 = arith.select %22, %25, %20 : vector<8x128xi1>, vector<8x128xf32>
    %cst_14 = arith.constant 13.7142859 : f32
    %27 = vector.broadcast %cst_14 : f32 to vector<8x128xf32>
    %28 = arith.cmpf olt, %0, %27 : vector<8x128xf32>
    %cst_15 = arith.constant 0.0133215813 : f32
    %29 = vector.broadcast %cst_15 : f32 to vector<8x128xf32>
    %30 = arith.select %28, %29, %24 : vector<8x128xi1>, vector<8x128xf32>
    %cst_16 = arith.constant 0.785889685 : f32
    %31 = vector.broadcast %cst_16 : f32 to vector<8x128xf32>
    %32 = arith.select %28, %31, %26 : vector<8x128xi1>, vector<8x128xf32>
    %cst_17 = arith.constant 9.14285755 : f32
    %33 = vector.broadcast %cst_17 : f32 to vector<8x128xf32>
    %34 = arith.cmpf olt, %0, %33 : vector<8x128xf32>
    %cst_18 = arith.constant 0.0326994359 : f32
    %35 = vector.broadcast %cst_18 : f32 to vector<8x128xf32>
    %36 = arith.select %34, %35, %30 : vector<8x128xi1>, vector<8x128xf32>
    %cst_19 = arith.constant 0.60872066 : f32
    %37 = vector.broadcast %cst_19 : f32 to vector<8x128xf32>
    %38 = arith.select %34, %37, %32 : vector<8x128xi1>, vector<8x128xf32>
    %cst_20 = arith.constant 4.57142878 : f32
    %39 = vector.broadcast %cst_20 : f32 to vector<8x128xf32>
    %40 = arith.cmpf olt, %0, %39 : vector<8x128xf32>
    %cst_21 = arith.constant 0.0564820878 : f32
    %41 = vector.broadcast %cst_21 : f32 to vector<8x128xf32>
    %42 = arith.select %40, %41, %36 : vector<8x128xi1>, vector<8x128xf32>
    %cst_22 = arith.constant 5.000000e-01 : f32
    %43 = vector.broadcast %cst_22 : f32 to vector<8x128xf32>
    %44 = arith.select %40, %43, %38 : vector<8x128xi1>, vector<8x128xf32>
    %cst_23 = arith.constant 0.000000e+00 : f32
    %45 = vector.broadcast %cst_23 : f32 to vector<8x128xf32>
    %46 = arith.cmpf olt, %0, %45 : vector<8x128xf32>
    %cst_24 = arith.constant 0.0564820878 : f32
    %47 = vector.broadcast %cst_24 : f32 to vector<8x128xf32>
    %48 = arith.select %46, %47, %42 : vector<8x128xi1>, vector<8x128xf32>
    %cst_25 = arith.constant 5.000000e-01 : f32
    %49 = vector.broadcast %cst_25 : f32 to vector<8x128xf32>
    %50 = arith.select %46, %49, %44 : vector<8x128xi1>, vector<8x128xf32>
    %cst_26 = arith.constant -4.57142878 : f32
    %51 = vector.broadcast %cst_26 : f32 to vector<8x128xf32>
    %52 = arith.cmpf olt, %0, %51 : vector<8x128xf32>
    %cst_27 = arith.constant 0.0326994359 : f32
    %53 = vector.broadcast %cst_27 : f32 to vector<8x128xf32>
    %54 = arith.select %52, %53, %48 : vector<8x128xi1>, vector<8x128xf32>
    %cst_28 = arith.constant 0.39127931 : f32
    %55 = vector.broadcast %cst_28 : f32 to vector<8x128xf32>
    %56 = arith.select %52, %55, %50 : vector<8x128xi1>, vector<8x128xf32>
    %cst_29 = arith.constant -9.14285755 : f32
    %57 = vector.broadcast %cst_29 : f32 to vector<8x128xf32>
    %58 = arith.cmpf olt, %0, %57 : vector<8x128xf32>
    %cst_30 = arith.constant 0.0133215813 : f32
    %59 = vector.broadcast %cst_30 : f32 to vector<8x128xf32>
    %60 = arith.select %58, %59, %54 : vector<8x128xi1>, vector<8x128xf32>
    %cst_31 = arith.constant 0.214110345 : f32
    %61 = vector.broadcast %cst_31 : f32 to vector<8x128xf32>
    %62 = arith.select %58, %61, %56 : vector<8x128xi1>, vector<8x128xf32>
    %cst_32 = arith.constant -13.7142859 : f32
    %63 = vector.broadcast %cst_32 : f32 to vector<8x128xf32>
    %64 = arith.cmpf olt, %0, %63 : vector<8x128xf32>
    %cst_33 = arith.constant 0.00463248696 : f32
    %65 = vector.broadcast %cst_33 : f32 to vector<8x128xf32>
    %66 = arith.select %64, %65, %60 : vector<8x128xi1>, vector<8x128xf32>
    %cst_34 = arith.constant 0.0949456245 : f32
    %67 = vector.broadcast %cst_34 : f32 to vector<8x128xf32>
    %68 = arith.select %64, %67, %62 : vector<8x128xi1>, vector<8x128xf32>
    %cst_35 = arith.constant -18.2857151 : f32
    %69 = vector.broadcast %cst_35 : f32 to vector<8x128xf32>
    %70 = arith.cmpf olt, %0, %69 : vector<8x128xf32>
    %cst_36 = arith.constant 0.00152023067 : f32
    %71 = vector.broadcast %cst_36 : f32 to vector<8x128xf32>
    %72 = arith.select %70, %71, %66 : vector<8x128xi1>, vector<8x128xf32>
    %cst_37 = arith.constant 0.0380357914 : f32
    %73 = vector.broadcast %cst_37 : f32 to vector<8x128xf32>
    %74 = arith.select %70, %73, %68 : vector<8x128xi1>, vector<8x128xf32>
    %cst_38 = arith.constant -22.8571434 : f32
    %75 = vector.broadcast %cst_38 : f32 to vector<8x128xf32>
    %76 = arith.cmpf olt, %0, %75 : vector<8x128xf32>
    %cst_39 = arith.constant 4.89311293E-4 : f32
    %77 = vector.broadcast %cst_39 : f32 to vector<8x128xf32>
    %78 = arith.select %76, %77, %72 : vector<8x128xi1>, vector<8x128xf32>
    %cst_40 = arith.constant 0.0144719193 : f32
    %79 = vector.broadcast %cst_40 : f32 to vector<8x128xf32>
    %80 = arith.select %76, %79, %74 : vector<8x128xi1>, vector<8x128xf32>
    %cst_41 = arith.constant -27.4285717 : f32
    %81 = vector.broadcast %cst_41 : f32 to vector<8x128xf32>
    %82 = arith.cmpf olt, %0, %81 : vector<8x128xf32>
    %cst_42 = arith.constant 1.56506794E-4 : f32
    %83 = vector.broadcast %cst_42 : f32 to vector<8x128xf32>
    %84 = arith.select %82, %83, %78 : vector<8x128xi1>, vector<8x128xf32>
    %cst_43 = arith.constant 0.00534356758 : f32
    %85 = vector.broadcast %cst_43 : f32 to vector<8x128xf32>
    %86 = arith.select %82, %85, %80 : vector<8x128xi1>, vector<8x128xf32>
    %cst_44 = arith.constant -3.200000e+01 : f32
    %87 = vector.broadcast %cst_44 : f32 to vector<8x128xf32>
    %88 = arith.cmpf olt, %0, %87 : vector<8x128xf32>
    %cst_45 = arith.constant 0.000000e+00 : f32
    %89 = vector.broadcast %cst_45 : f32 to vector<8x128xf32>
    %90 = arith.select %88, %89, %84 : vector<8x128xi1>, vector<8x128xf32>
    %cst_46 = arith.constant 3.35350138E-4 : f32
    %91 = vector.broadcast %cst_46 : f32 to vector<8x128xf32>
    %92 = arith.select %88, %91, %86 : vector<8x128xi1>, vector<8x128xf32>
    %93 = arith.mulf %90, %0 : vector<8x128xf32>
    %94 = arith.addf %93, %92 : vector<8x128xf32>
    %cst_47 = arith.constant 1.250000e-01 : f32
    %95 = vector.broadcast %cst_47 : f32 to vector<8x128xf32>
    %96 = arith.mulf %0, %95 : vector<8x128xf32>
    %97 = math.tanh %96 : vector<8x128xf32>
    %cst_48 = arith.constant 5.000000e-01 : f32
    %98 = vector.broadcast %cst_48 : f32 to vector<8x128xf32>
    %99 = arith.mulf %98, %97 : vector<8x128xf32>
    %cst_49 = arith.constant 5.000000e-01 : f32
    %100 = vector.broadcast %cst_49 : f32 to vector<8x128xf32>
    %101 = arith.addf %99, %100 : vector<8x128xf32>
    %102 = arith.subf %94, %101 : vector<8x128xf32>
    %103 = arith.addf %102, %101 : vector<8x128xf32>
    %c0_50 = arith.constant 0 : index
    %c0_51 = arith.constant 0 : index
    %104 = vector.load %arg2[%c0_50, %c0_51] : memref<8x128xf32, #tpu.memory_space<vmem>>, vector<8x128xf32>
    tpu.vector_store %arg2[%c0_50, %c0_51], %103 {strides = array<i32>} : memref<8x128xf32, #tpu.memory_space<vmem>>, vector<8x128xf32>,
    return
  }
  func.func @transform_0(%arg0: i32) -> (i32, i32) {
    %c0_i32 = arith.constant 0 : i32
    %c0_i32_0 = arith.constant 0 : i32
    return %arg0, %c0_i32 : i32, i32
  }
  func.func @transform_1(%arg0: i32) -> (i32, i32) {
    %c0_i32 = arith.constant 0 : i32
    %c0_i32_0 = arith.constant 0 : i32
    return %arg0, %c0_i32 : i32, i32
  }
}

</mosaic_0001>

<llo_original>
// kernel: tpu_custom_call.1
$region0: #{tpu_custom_call.1}
  #allocation0 [shape = 'u32[]', space=smem, size = 0x4, offset = 0x4, fixed_abs, tag = 'smem constant byte address 0x4 - core index']
  #allocation1 [shape = 'u32[72,128]{1,0:T(1,128)}', space=vmem, size = 0x9000, scoped, tag = 'internal scratch']
  %s0 = inlined_call_operand.hbm [shape: f32[16,128], index: 0, kind: input, shape index: {}]
  %s1 = inlined_call_operand.hbm [shape: f32[16,128], index: 1, kind: output, shape index: {}]
  %s2 = sld [smem:[#allocation0]]
  $region41: #{tpu_custom_call.1} parent=0
    _
  %s4 = ssub.s32 1, %s2
  %s5 = scalar_select 0, %s4, %s2
  $region1: #{tpu_custom_call.1} parent=0
    #allocation2 [shape = 'u8[8192]{0}', space=vmem, size = 0x2000, scoped, tag = 'input window, operand 0']
    #allocation3 [shape = 's32[2]{0}', space=sflag, size = 0x8, scoped, tag = 'scoped memory for tpu_custom_call.1']
    #allocation4 [shape = 's32[2]{0}', space=sflag, size = 0x8, scoped, tag = 'scoped memory for tpu_custom_call.1']
    #allocation5 [shape = 'u8[8192]{0}', space=vmem, size = 0x2000, scoped, tag = 'output window, operand 0']
    %6 = vsyncpa [#allocation3], 0
    %s7 = scalar_lea.sflag [#allocation3], 1
    %8 = vsyncpa %s7, 0
    %9 = vsyncpa [#allocation4], 0
    %s10 = scalar_lea.sflag [#allocation4], 1
    %11 = vsyncpa %s10, 0
    loop: start=0, step=1, limit=4
    $region2: #{tpu_custom_call.1} parent=1 // loop_pre_header
      _
    $region3: #{tpu_custom_call.1} parent=1 // loop_header
      %s13 = sphi 0, %s17
      %p14 = scmp.ge.s32.totalorder %s13, 4
      %s23 = sphi 0, %s25
      %s26 = sphi 0, %s23
      %s27 = sphi 0, %s26
      %s43 = sphi 0, %s27
      %s49 = sphi 0, %s51
      %s52 = sphi 0, %s49
      %s53 = sphi 0, %s52
      %s69 = sphi 0, %s53
    $region4: #{tpu_custom_call.1} parent=1 // loop_header_branch
      %16 = sbr.rel (%p14) target = $region8
    $region5: #{tpu_custom_call.1} parent=1 // loop_body
      %s18 = ssub.s32 %s13, 1
      %s19 = ssub.s32 %s13, 2
      %s20 = sadd.s32 %s13, 1
      %s21 = ssub.s32 %s13, %s20
      %p22 = scmp.eq.s32.totalorder %s21, 0
      %s24 = sadd.s32 %s23, 1
      %s25 = scalar_select %p22, %s23, %s24
      %p28 = pneg %p22
      %p29 = scmp.eq.s32.totalorder %s13, 1
      %p30 = por %p28, %p29
      %p31 = scmp.ne.s32.totalorder %s23, %s26
      %p32 = scmp.eq.s32.totalorder %s13, 0
      %p33 = por %p31, %p32
      %p34 = scmp.ne.s32.totalorder %s23, %s26
      %p35 = scmp.eq.s32.totalorder %s18, 1
      %p36 = por %p34, %p35
      %p37 = scmp.ne.s32.totalorder %s26, %s27
      %p38 = scmp.eq.s32.totalorder %s18, 0
      %p39 = por %p37, %p38
      %p40 = scmp.ne.s32.totalorder %s26, %s27
      %p41 = scmp.eq.s32.totalorder %s19, 1
      %p42 = por %p40, %p41
      %p44 = scmp.ne.s32.totalorder %s27, %s43
      %p45 = scmp.eq.s32.totalorder %s19, 0
      %p46 = por %p44, %p45
      %s47 = ssub.s32 %s13, %s20
      %p48 = scmp.eq.s32.totalorder %s47, 0
      %s50 = sadd.s32 %s49, 1
      %s51 = scalar_select %p48, %s49, %s50
      %p54 = pneg %p48
      %p55 = scmp.eq.s32.totalorder %s13, 1
      %p56 = por %p54, %p55
      %p57 = scmp.ne.s32.totalorder %s49, %s52
      %p58 = scmp.eq.s32.totalorder %s13, 0
      %p59 = por %p57, %p58
      %p60 = scmp.ne.s32.totalorder %s49, %s52
      %p61 = scmp.eq.s32.totalorder %s18, 1
      %p62 = por %p60, %p61
      %p63 = scmp.ne.s32.totalorder %s52, %s53
      %p64 = scmp.eq.s32.totalorder %s18, 0
      %p65 = por %p63, %p64
      %p66 = scmp.ne.s32.totalorder %s52, %s53
      %p67 = scmp.eq.s32.totalorder %s19, 1
      %p68 = por %p66, %p67
      %p70 = scmp.ne.s32.totalorder %s53, %s69
      %p71 = scmp.eq.s32.totalorder %s19, 0
      %p72 = por %p70, %p71
      %p73 = scmp.le.s32.totalorder 1, %s13
      %p74 = scmp.lt.s32.totalorder %s13, 3
      %p75 = pnand %p73, %p74
      %p76 = pneg %p75
      // Predicated region
      $region9: #{tpu_custom_call.1} parent=5 // pred_check
        _
      $region10: #{tpu_custom_call.1} parent=5 // pred_check_branch
        %78 = sbr.rel (%p75) target = $region12
      $region11: #{tpu_custom_call.1} parent=5 // pred_region
        %s79 = ssub.s32 %s13, 1
      $region12: #{tpu_custom_call.1} parent=5 // pred_fallthru
        _
      %p80 = scmp.lt.s32.totalorder %s13, 2
      // Predicated region
      $region13: #{tpu_custom_call.1} parent=5 // pred_check
        %p81 = pneg %p80
      $region14: #{tpu_custom_call.1} parent=5 // pred_check_branch
        %83 = sbr.rel (%p81) target = $region16
      $region15: #{tpu_custom_call.1} parent=5 // pred_region
        // Predicated region
        $region17: #{tpu_custom_call.1} parent=15 // pred_check
          %p84 = pneg %p33
        $region18: #{tpu_custom_call.1} parent=15 // pred_check_branch
          %86 = sbr.rel (%p84) target = $region20
        $region19: #{tpu_custom_call.1} parent=15 // pred_region
          %s87 = sand.u32 %s23, 1
          %s88 = scalar_lea.sflag [#allocation3], %s87
          %s89 = sand.u32 %s23, 1
          %s90 = smul.addr %s89, 8
          %s91 = scalar_lea.vmem [#allocation2], %s90
          %93 = vsyncadd %s88, 0
          %s94 = smul.addr %s13, 8
          %s95 = scalar_lea.hbm %s0, %s94
          %s97 = sshll.u32 %s95, 4
          %s98 = int_to_ptr.hbm [resolvable:$true] %s97
          %s99 = sshll.u32 %s91, 4
          %s100 = int_to_ptr.vmem [resolvable:$true] %s99
          %102 = dma.hbm_to_vmem [thread:$0]  %s98, 128, %s100, %s88
        $region20: #{tpu_custom_call.1} parent=15 // pred_fallthru
          _
      $region16: #{tpu_custom_call.1} parent=5 // pred_fallthru
        _
      %p103 = scmp.le.s32.totalorder 1, %s13
      %p104 = scmp.lt.s32.totalorder %s13, 3
      %p105 = pnand %p103, %p104
      %p106 = pneg %p105
      // Predicated region
      $region21: #{tpu_custom_call.1} parent=5 // pred_check
        _
      $region22: #{tpu_custom_call.1} parent=5 // pred_check_branch
        %108 = sbr.rel (%p105) target = $region24
      $region23: #{tpu_custom_call.1} parent=5 // pred_region
        %s109 = ssub.s32 %s13, 1
        %s110 = sand.u32 %s26, 1
        %s111 = scalar_lea.sflag [#allocation3], %s110
        %s112 = sand.u32 %s26, 1
        %s113 = smul.addr %s112, 8
        %s114 = scalar_lea.vmem [#allocation2], %s113
        // Predicated region
        $region25: #{tpu_custom_call.1} parent=23 // pred_check
          %p115 = pneg %p39
        $region26: #{tpu_custom_call.1} parent=23 // pred_check_branch
          %117 = sbr.rel (%p115) target = $region28
        $region27: #{tpu_custom_call.1} parent=23 // pred_region
          %119 = dma.done %s111, 128
        $region28: #{tpu_custom_call.1} parent=23 // pred_fallthru
          _
        %s120 = sand.u32 %s26, 1
        %s121 = scalar_lea.sflag [#allocation3], %s120
        %s122 = sand.u32 %s26, 1
        %s123 = smul.addr %s122, 8
        %s124 = scalar_lea.vmem [#allocation2], %s123
        %p125 = pneg %p39
        %p126 = pneg %p36
        %p127 = pneg %p65
        %p128 = pneg %p62
        %s129 = sand.u32 %s52, 1
        %s130 = scalar_lea.sflag [#allocation4], %s129
        %s131 = sand.u32 %s52, 1
        %s132 = smul.addr %s131, 8
        %s133 = scalar_lea.vmem [#allocation5], %s132
        %v134 = vld [vmem:[%s114] sm:$0xff]
        %vm135 = vcmp.lt.f32.partialorder %v134, 32.0
        %v136 = vsel %vm135, 0.0001565068, 0.0
        %v137 = vsel %vm135, 0.99465644, 0.99966466
        %vm138 = vcmp.lt.f32.partialorder %v134, 27.428572
        %v139 = vsel %vm138, 0.0004893113, %v136
        %v140 = vsel %vm138, 0.98552805, %v137
        %vm141 = vcmp.lt.f32.partialorder %v134, 22.857143
        %v142 = vsel %vm141, 0.0015202307, %v139
        %v143 = vsel %vm141, 0.9619642, %v140
        %vm144 = vcmp.lt.f32.partialorder %v134, 18.285715
        %v145 = vsel %vm144, 0.004632487, %v142
        %v146 = vsel %vm144, 0.9050544, %v143
        %vm147 = vcmp.lt.f32.partialorder %v134, 13.714286
        %v148 = vsel %vm147, 0.013321581, %v145
        %v149 = vsel %vm147, 0.7858897, %v146
        %vm150 = vcmp.lt.f32.partialorder %v134, 9.142858
        %v151 = vsel %vm150, 0.032699436, %v148
        %v152 = vsel %vm150, 0.60872066, %v149
        %vm153 = vcmp.lt.f32.partialorder %v134, 4.571429
        %v154 = vsel %vm153, 0.056482088, %v151
        %v155 = vsel %vm153, 0.5, %v152
        %vm156 = vcmp.lt.f32.partialorder %v134, 0.0
        %v157 = vsel %vm156, 0.056482088, %v154
        %v158 = vsel %vm156, 0.5, %v155
        %vm159 = vcmp.lt.f32.partialorder %v134, -4.571429
        %v160 = vsel %vm159, 0.032699436, %v157
        %v161 = vsel %vm159, 0.3912793, %v158
        %vm162 = vcmp.lt.f32.partialorder %v134, -9.142858
        %v163 = vsel %vm162, 0.013321581, %v160
        %v164 = vsel %vm162, 0.21411034, %v161
        %vm165 = vcmp.lt.f32.partialorder %v134, -13.714286
        %v166 = vsel %vm165, 0.004632487, %v163
        %v167 = vsel %vm165, 0.094945624, %v164
        %vm168 = vcmp.lt.f32.partialorder %v134, -18.285715
        %v169 = vsel %vm168, 0.0015202307, %v166
        %v170 = vsel %vm168, 0.03803579, %v167
        %vm171 = vcmp.lt.f32.partialorder %v134, -22.857143
        %v172 = vsel %vm171, 0.0004893113, %v169
        %v173 = vsel %vm171, 0.014471919, %v170
        %vm174 = vcmp.lt.f32.partialorder %v134, -27.428572
        %v175 = vsel %vm174, 0.0001565068, %v172
        %v176 = vsel %vm174, 0.0053435676, %v173
        %vm177 = vcmp.lt.f32.partialorder %v134, -32.0
        %v178 = vsel %vm177, 0.0, %v175
        %v179 = vsel %vm177, 0.00033535014, %v176
        %v180 = vmul.f32 %v178, %v134
        %v181 = vadd.f32 %v180, %v179
        %v182 = vmul.f32 %v134, 0.125
        %v183 = vtanh.pop %v182
        %v184 = vmul.f32 %v183, 0.5
        %v185 = vadd.f32 %v184, 0.5
        %v186 = vsub.f32 %v181, %v185
        %v187 = vadd.f32 %v186, %v185
        %188 = vst [vmem:[%s133] sm:$0xff] %v187
        %s189 = sand.u32 %s52, 1
        %s190 = scalar_lea.sflag [#allocation4], %s189
        %s191 = sand.u32 %s52, 1
        %s192 = smul.addr %s191, 8
        %s193 = scalar_lea.vmem [#allocation5], %s192
        // Predicated region
        $region29: #{tpu_custom_call.1} parent=23 // pred_check
          %p194 = pneg %p62
        $region30: #{tpu_custom_call.1} parent=23 // pred_check_branch
          %196 = sbr.rel (%p194) target = $region32
        $region31: #{tpu_custom_call.1} parent=23 // pred_region
          %198 = vsyncadd %s190, 0
          %s199 = smul.addr %s18, 8
          %s200 = scalar_lea.hbm %s1, %s199
          %s202 = sshll.u32 %s193, 4
          %s203 = int_to_ptr.vmem [resolvable:$true] %s202
          %s204 = sshll.u32 %s200, 4
          %s205 = int_to_ptr.hbm [resolvable:$true] %s204
          %207 = dma.vmem_to_hbm [thread:$0]  %s203, 128, %s205, %s190
        $region32: #{tpu_custom_call.1} parent=23 // pred_fallthru
          _
      $region24: #{tpu_custom_call.1} parent=5 // pred_fallthru
        _
      %p208 = scmp.le.s32.totalorder 2, %s13
      // Predicated region
      $region33: #{tpu_custom_call.1} parent=5 // pred_check
        %p209 = pneg %p208
      $region34: #{tpu_custom_call.1} parent=5 // pred_check_branch
        %211 = sbr.rel (%p209) target = $region36
      $region35: #{tpu_custom_call.1} parent=5 // pred_region
        %s212 = ssub.s32 %s13, 2
        // Predicated region
        $region37: #{tpu_custom_call.1} parent=35 // pred_check
          %p213 = pneg %p68
        $region38: #{tpu_custom_call.1} parent=35 // pred_check_branch
          %215 = sbr.rel (%p213) target = $region40
        $region39: #{tpu_custom_call.1} parent=35 // pred_region
          %s216 = sand.u32 %s53, 1
          %s217 = scalar_lea.sflag [#allocation4], %s216
          %s218 = sand.u32 %s53, 1
          %s219 = smul.addr %s218, 8
          %s220 = scalar_lea.vmem [#allocation5], %s219
          %222 = dma.done %s217, 128
        $region40: #{tpu_custom_call.1} parent=35 // pred_fallthru
          _
      $region36: #{tpu_custom_call.1} parent=5 // pred_fallthru
        _
    $region6: #{tpu_custom_call.1} parent=1 // loop_footer
      %s17 = sadd.s32 1, %s13
    $region7: #{tpu_custom_call.1} parent=1 // loop_footer_branch
      %12 = sbr.rel target = $region3
    $region8: #{tpu_custom_call.1} parent=1 // loop_exit
      _
    %223 = vsyncpa [#allocation3], 1
    %s224 = scalar_lea.sflag [#allocation3], 1
    %225 = vsyncpa %s224, 1
    %226 = vsyncpa [#allocation4], 1
    %s227 = scalar_lea.sflag [#allocation4], 1
    %228 = vsyncpa %s227, 1

</llo_original>
